<compile_context>
chip_gen: v5e
topology: v5e:2x2
jax: 0.10.0
libtpu: 0.0.40
codegen_flags: <defaults>
</compile_context>

<pallas_src>
import jax
import jax.numpy as jnp
from jax.experimental import pallas as pl
from jax.experimental.pallas import tpu as pltpu

HIDDEN_PAD = 128  # native lane width


def _round_up(x: int, m: int) -> int:
    return ((x + m - 1) // m) * m


def critic_kernel(x_ref, w1_ref, b1_ref, w2_ref, b2_ref, o_ref):
    # Layer 1 on the MXU: (tm, in_dim) bf16 @ (in_dim, 128) bf16 -> f32.
    h = jnp.dot(x_ref[...], w1_ref[...], preferred_element_type=jnp.float32)
    h = jnp.maximum(h + b1_ref[...], 0.0)                 # bias + ReLU (f32, VPU)

    # Layer 2 (N=1): VPU multiply + lane reduction, written lane-dense.
    # Split the leading dim (free, no data movement): h3[s, l, j] = h[s*128+l, j].
    s_sub, lanes = o_ref.shape                            # (tm//128, 128)
    h3 = h.reshape(s_sub, lanes, h.shape[-1])
    v = jnp.sum(h3 * w2_ref[...], axis=-1)                # (tm//128, 128), XLU reduce
    # Padded hidden columns are exactly zero in w2_ref, so they contribute 0.
    o_ref[...] = (v + b2_ref[0, 0]).astype(o_ref.dtype)   # b2 scalar from SMEM


def critic_forward(state, w1, b1, w2, b2, *, block_rows: int = 4096):
    """value = relu(state @ w1 + b1) @ w2 + b2 via a pipelined Pallas kernel.

    state: [B, in_dim]; w1: [in_dim, 64]; b1: [1, 64]; w2: [64, 1]; b2: [1, 1].
    """
    B, in_dim = state.shape
    hidden = w1.shape[1]

    # ---- layout plumbing (tiny weights; done once per call, outside kernel) ----
    x = state.astype(jnp.bfloat16)                 # stream the big operand as bf16
    w1p = jnp.zeros((in_dim, HIDDEN_PAD), jnp.bfloat16).at[:, :hidden].set(
        w1.astype(jnp.bfloat16))
    b1p = jnp.zeros((1, HIDDEN_PAD), jnp.float32).at[:, :hidden].set(
        jnp.asarray(b1, jnp.float32).reshape(1, hidden))
    w2p = jnp.zeros((1, HIDDEN_PAD), jnp.float32).at[:, :hidden].set(
        jnp.asarray(w2, jnp.float32).reshape(1, hidden))
    b2p = jnp.asarray(b2, jnp.float32).reshape(1, 1)

    # ---- batch tiling: tm rows per grid step (multiple of 128 for the
    #      lane-dense output layout) ----
    tm = max(128, min(_round_up(block_rows, 128), _round_up(B, 128)))
    if B > 128:
        # v7x: guarantee >= 2 grid steps so the "parallel" axis spans both TCs.
        tm = min(tm, _round_up(pl.cdiv(B, 2), 128))
    n_tiles = pl.cdiv(B, tm)        # ragged tail handled by Pallas, no jnp.pad
    s_sub = tm // 128
    rows_pad = n_tiles * tm

    out = pl.pallas_call(
        critic_kernel,
        out_shape=jax.ShapeDtypeStruct((n_tiles, s_sub, 128), jnp.float32),
        grid=(n_tiles,),
        in_specs=[
            pl.BlockSpec((tm, in_dim), lambda i: (i, 0)),          # streamed x tiles
            pl.BlockSpec((in_dim, HIDDEN_PAD), lambda i: (0, 0)),  # VMEM-resident W1
            pl.BlockSpec((1, HIDDEN_PAD), lambda i: (0, 0)),       # VMEM-resident b1
            pl.BlockSpec((1, HIDDEN_PAD), lambda i: (0, 0)),       # VMEM-resident w2 row
            pl.BlockSpec(memory_space=pltpu.MemorySpace.SMEM),     # b2 scalar
        ],
        out_specs=pl.BlockSpec((None, s_sub, 128), lambda i: (i, 0, 0)),
        compiler_params=pltpu.CompilerParams(
            dimension_semantics=("parallel",)),
    )(x, w1p, b1p, w2p, b2p)

    # Row-major flatten restores per-row order; drop the ragged tail rows.
    return out.reshape(rows_pad, 1)[:B]


def init_params(key, in_dim: int, hidden: int = 64):
    """Deterministic parameter init mirroring the PyTorch module's __init__."""
    k1, k2, k3, k4 = jax.random.split(key, 4)
    bound1 = 1.0 / jnp.sqrt(jnp.float32(in_dim))
    # stored as [in_features, out_features]
    w1 = jax.random.uniform(k1, (in_dim, hidden), jnp.float32, -bound1, bound1)
    b1 = jax.random.uniform(k2, (1, hidden), jnp.float32, -bound1, bound1)
    init_w = 0.003
    w2 = jax.random.uniform(k3, (hidden, 1), jnp.float32, -init_w, init_w)
    b2 = jax.random.uniform(k4, (1, 1), jnp.float32, -init_w, init_w)
    return w1, b1, w2, b2


def reference_forward(state, w1, b1, w2, b2):
    """Pure-JAX reference in exact f32 (HIGHEST precision matmuls)."""
    h = jnp.maximum(
        jax.lax.dot(state, w1, precision=jax.lax.Precision.HIGHEST) + b1, 0.0)
    return jax.lax.dot(h, w2, precision=jax.lax.Precision.HIGHEST) + b2


def _bf16_rounded_reference(state, w1, b1, w2, b2):
    # Same math as the kernel: state/W1 rounded to bf16, everything else f32.
    return reference_forward(
        state.astype(jnp.bfloat16).astype(jnp.float32),
        w1.astype(jnp.bfloat16).astype(jnp.float32), b1, w2, b2)


if __name__ == "__main__":
    key = jax.random.PRNGKey(0)
    k_x, k_p, k_x2 = jax.random.split(key, 3)

    B, in_dim = 8, 32
    state = jax.random.normal(k_x, (B, in_dim), jnp.float32)
    w1, b1, w2, b2 = init_params(k_p, in_dim)

    value = jax.block_until_ready(critic_forward(state, w1, b1, w2, b2))
    assert value.shape == (B, 1)
    # Tight check vs. a reference using the same bf16-rounded inputs.
    ref_bf = _bf16_rounded_reference(state, w1, b1, w2, b2)
    assert jnp.allclose(value, ref_bf, atol=1e-4, rtol=1e-4)
    # Loose sanity check vs. the full-f32 reference (bf16 streaming shifts ~1e-3).
    ref_f32 = reference_forward(state, w1, b1, w2, b2)
    assert jnp.allclose(value, ref_f32, atol=1e-2, rtol=1e-2)

    # Exercise the multi-tile (grid > 1) + ragged-batch path.
    B2 = 200
    state2 = jax.random.normal(k_x2, (B2, in_dim), jnp.float32)
    value2 = jax.block_until_ready(
        critic_forward(state2, w1, b1, w2, b2, block_rows=128))
    assert value2.shape == (B2, 1)
    ref2_bf = _bf16_rounded_reference(state2, w1, b1, w2, b2)
    assert jnp.allclose(value2, ref2_bf, atol=1e-4, rtol=1e-4)
    ref2_f32 = reference_forward(state2, w1, b1, w2, b2)
    assert jnp.allclose(value2, ref2_f32, atol=1e-2, rtol=1e-2)

    print("KERNEL_OK")
</pallas_src>

<mosaic_0001>
module attributes {stable_mosaic.version = 11 : i64} {
  func.func @critic_kernel(%arg0: i32, %arg1: memref<128x32xbf16, #tpu.memory_space<vmem>>, %arg2: memref<32x128xbf16, #tpu.memory_space<vmem>>, %arg3: memref<1x128xf32, #tpu.memory_space<vmem>>, %arg4: memref<1x128xf32, #tpu.memory_space<vmem>>, %arg5: memref<1x1xf32, #tpu.memory_space<smem>>, %arg6: memref<1x1x128xf32, #tpu.memory_space<vmem>>) attributes {dimension_semantics = [#tpu.dimension_semantics<parallel>], iteration_bounds = array<i64: 1>, scalar_prefetch = 0 : i64, scratch_operands = 0 : i64, tpu.core_type = #tpu.core_type<tc>, window_params = [{transform_indices = @transform_0, window_bounds = array<i64: 128, 32>}, {pipeline_mode = #tpu.pipeline_mode<synchronous>, transform_indices = @transform_1, window_bounds = array<i64: 32, 128>}, {pipeline_mode = #tpu.pipeline_mode<synchronous>, transform_indices = @transform_2, window_bounds = array<i64: 1, 128>}, {pipeline_mode = #tpu.pipeline_mode<synchronous>, transform_indices = @transform_3, window_bounds = array<i64: 1, 128>}, {transform_indices = @transform_4, window_bounds = array<i64: 1, 1>}, {transform_indices = @transform_5, window_bounds = array<i64: 1, 1, 128>}]} {
    %c0 = arith.constant 0 : index
    %c0_0 = arith.constant 0 : index
    %0 = vector.load %arg1[%c0, %c0_0] : memref<128x32xbf16, #tpu.memory_space<vmem>>, vector<128x32xbf16>
    %c0_1 = arith.constant 0 : index
    %c0_2 = arith.constant 0 : index
    %1 = vector.load %arg2[%c0_1, %c0_2] : memref<32x128xbf16, #tpu.memory_space<vmem>>, vector<32x128xbf16>
    %cst = arith.constant dense<0.000000e+00> : vector<128x128xf32>
    %2 = tpu.matmul %0, %1, %cst {dimension_numbers = #tpu.dot_dimension_numbers<[1], [0], [0], [1], [0, 0, 1, 1], [], []>} : vector<128x32xbf16>, vector<32x128xbf16>, vector<128x128xf32> -> vector<128x128xf32>
    %c0_3 = arith.constant 0 : index
    %c0_4 = arith.constant 0 : index
    %3 = vector.load %arg3[%c0_3, %c0_4] : memref<1x128xf32, #tpu.memory_space<vmem>>, vector<1x128xf32>
    %4 = vector.broadcast %3 : vector<1x128xf32> to vector<128x128xf32>
    %5 = arith.addf %2, %4 : vector<128x128xf32>
    %cst_5 = arith.constant 0.000000e+00 : f32
    %6 = vector.broadcast %cst_5 : f32 to vector<128x128xf32>
    %7 = arith.maximumf %5, %6 : vector<128x128xf32>
    %8 = vector.shape_cast %7 : vector<128x128xf32> to vector<1x128x128xf32>
    %c0_6 = arith.constant 0 : index
    %c0_7 = arith.constant 0 : index
    %9 = vector.load %arg4[%c0_6, %c0_7] : memref<1x128xf32, #tpu.memory_space<vmem>>, vector<1x128xf32>
    %10 = vector.shape_cast %9 : vector<1x128xf32> to vector<1x1x128xf32>
    %11 = vector.broadcast %10 : vector<1x1x128xf32> to vector<1x128x128xf32>
    %12 = arith.mulf %8, %11 : vector<1x128x128xf32>
    %cst_8 = arith.constant dense<0.000000e+00> : vector<1x128xf32>
    %13 = vector.multi_reduction <add>, %12, %cst_8 [2] : vector<1x128x128xf32> to vector<1x128xf32>
    %c0_9 = arith.constant 0 : index
    %c0_10 = arith.constant 0 : index
    %14 = memref.load %arg5[%c0_9, %c0_10] : memref<1x1xf32, #tpu.memory_space<smem>>
    %15 = vector.broadcast %14 : f32 to vector<1x128xf32>
    %16 = arith.addf %13, %15 : vector<1x128xf32>
    %c0_11 = arith.constant 0 : index
    %c0_12 = arith.constant 0 : index
    %c0_13 = arith.constant 0 : index
    %17 = vector.load %arg6[%c0_11, %c0_12, %c0_13] : memref<1x1x128xf32, #tpu.memory_space<vmem>>, vector<1x1x128xf32>
    %18 = vector.shape_cast %17 : vector<1x1x128xf32> to vector<1x128xf32>
    %19 = vector.shape_cast %16 : vector<1x128xf32> to vector<1x1x128xf32>
    tpu.vector_store %arg6[%c0_11, %c0_12, %c0_13], %19 {strides = array<i32>} : memref<1x1x128xf32, #tpu.memory_space<vmem>>, vector<1x1x128xf32>,
    return
  }
  func.func @transform_0(%arg0: i32) -> (i32, i32) {
    %c0_i32 = arith.constant 0 : i32
    %c0_i32_0 = arith.constant 0 : i32
    return %arg0, %c0_i32 : i32, i32
  }
  func.func @transform_1(%arg0: i32) -> (i32, i32) {
    %c0_i32 = arith.constant 0 : i32
    %c0_i32_0 = arith.constant 0 : i32
    %c0_i32_1 = arith.constant 0 : i32
    return %c0_i32, %c0_i32_0 : i32, i32
  }
  func.func @transform_2(%arg0: i32) -> (i32, i32) {
    %c0_i32 = arith.constant 0 : i32
    %c0_i32_0 = arith.constant 0 : i32
    %c0_i32_1 = arith.constant 0 : i32
    return %c0_i32, %c0_i32_0 : i32, i32
  }
  func.func @transform_3(%arg0: i32) -> (i32, i32) {
    %c0_i32 = arith.constant 0 : i32
    %c0_i32_0 = arith.constant 0 : i32
    %c0_i32_1 = arith.constant 0 : i32
    return %c0_i32, %c0_i32_0 : i32, i32
  }
  func.func @transform_4(%arg0: i32) -> (i32, i32) {
    %c0_i32 = arith.constant 0 : i32
    %c0_i32_0 = arith.constant 0 : i32
    %c0_i32_1 = arith.constant 0 : i32
    return %c0_i32, %c0_i32_0 : i32, i32
  }
  func.func @transform_5(%arg0: i32) -> (i32, i32, i32) {
    %c0_i32 = arith.constant 0 : i32
    %c0_i32_0 = arith.constant 0 : i32
    %c0_i32_1 = arith.constant 0 : i32
    return %arg0, %c0_i32, %c0_i32_0 : i32, i32, i32
  }
}

</mosaic_0001>

<llo_original>
// kernel: tpu_custom_call.1
$region0: #{tpu_custom_call.1}
  #allocation0 [shape = 'u32[]', space=smem, size = 0x4, offset = 0x4, fixed_abs, tag = 'smem constant byte address 0x4 - core index']
  #allocation1 [shape = 'u32[72,128]{1,0:T(1,128)}', space=vmem, size = 0x9000, scoped, tag = 'internal scratch']
  #allocation2 [shape = 'f32[1,1]{1,0:T(1,128)S(6)}', space=smem, size = 0x200, scoped, tag = 'scoped memory for tpu_custom_call.1']
  %s0 = inlined_call_operand.hbm [shape: bf16[8,32], index: 0, kind: input, shape index: {}]
  %s1 = inlined_call_operand.hbm [shape: bf16[32,128], index: 1, kind: input, shape index: {}]
  %s2 = inlined_call_operand.vmem [shape: f32[1,128], index: 2, kind: input, shape index: {}]
  %s3 = inlined_call_operand.vmem [shape: f32[1,128], index: 3, kind: input, shape index: {}]
  %s4 = inlined_call_operand.<no memory space> [shape: f32[1,1], index: 4, kind: input, shape index: {}]
  %s5 = inlined_call_operand.hbm [shape: f32[1,1,128], index: 5, kind: output, shape index: {}]
  %s6 = sld [smem:[#allocation0]]
  $region38: #{tpu_custom_call.1} parent=0
    _
  %s8 = ssub.s32 1, %s6
  %s9 = scalar_select 0, %s8, %s6
  %10 = sst [smem:[#allocation2]] %s4
  $region1: #{tpu_custom_call.1} parent=0
    #allocation3 [shape = 'u8[32768]{0}', space=vmem, size = 0x8000, scoped, tag = 'input window, operand 0, single buffered']
    #allocation4 [shape = 's32[1]{0}', space=sflag, size = 0x4, scoped, tag = 'scoped memory for tpu_custom_call.1']
    #allocation5 [shape = 's32[1]{0}', space=sflag, size = 0x4, scoped, tag = 'scoped memory for tpu_custom_call.1']
    #allocation6 [shape = 'u8[8192]{0}', space=vmem, size = 0x2000, scoped, tag = 'input window, operand 1, single buffered']
    #allocation7 [shape = 's32[1]{0}', space=sflag, size = 0x4, scoped, tag = 'scoped memory for tpu_custom_call.1']
    #allocation8 [shape = 'u8[512]{0}', space=vmem, size = 0x400, scoped, tag = 'output window, operand 0, single buffered']
    %11 = vsyncpa [#allocation4], 0
    %12 = vsyncpa [#allocation7], 0
    %13 = vsyncpa [#allocation5], 0
    // Predicated region
    $region2: #{tpu_custom_call.1} parent=1 // pred_check
      _
    $region3: #{tpu_custom_call.1} parent=1 // pred_check_branch
      %15 = sbr.rel (0) target = $region5
    $region4: #{tpu_custom_call.1} parent=1 // pred_region
      %17 = vsyncadd [#allocation4], 960
      %s18 = sshll.u32 %s0, 4
      %s19 = int_to_ptr.hbm [resolvable:$true] %s18
      %s20 = sshll.u32 [#allocation3], 4
      %s21 = int_to_ptr.vmem [resolvable:$true] %s20
      %26 = dma.hbm_to_vmem [thread:$0]  %s19, 64, %s21, [#allocation4], 64, 64, 4
    $region5: #{tpu_custom_call.1} parent=1 // pred_fallthru
      _
    // Predicated region
    $region6: #{tpu_custom_call.1} parent=1 // pred_check
      _
    $region7: #{tpu_custom_call.1} parent=1 // pred_check_branch
      %28 = sbr.rel (0) target = $region9
    $region8: #{tpu_custom_call.1} parent=1 // pred_region
      %30 = vsyncadd [#allocation7], 0
      %s31 = sshll.u32 %s1, 4
      %s32 = int_to_ptr.hbm [resolvable:$true] %s31
      %s33 = sshll.u32 [#allocation6], 4
      %s34 = int_to_ptr.vmem [resolvable:$true] %s33
      %39 = dma.hbm_to_vmem [thread:$0]  %s32, 256, %s34, [#allocation7], 64, 64, 4
    $region9: #{tpu_custom_call.1} parent=1 // pred_fallthru
      _
    // Predicated region
    $region10: #{tpu_custom_call.1} parent=1 // pred_check
      _
    $region11: #{tpu_custom_call.1} parent=1 // pred_check_branch
      %41 = sbr.rel (0) target = $region13
    $region12: #{tpu_custom_call.1} parent=1 // pred_region
      _
    $region13: #{tpu_custom_call.1} parent=1 // pred_fallthru
      _
    // Predicated region
    $region14: #{tpu_custom_call.1} parent=1 // pred_check
      _
    $region15: #{tpu_custom_call.1} parent=1 // pred_check_branch
      %43 = sbr.rel (0) target = $region17
    $region16: #{tpu_custom_call.1} parent=1 // pred_region
      _
    $region17: #{tpu_custom_call.1} parent=1 // pred_fallthru
      _
    // Predicated region
    $region18: #{tpu_custom_call.1} parent=1 // pred_check
      _
    $region19: #{tpu_custom_call.1} parent=1 // pred_check_branch
      %45 = sbr.rel (0) target = $region21
    $region20: #{tpu_custom_call.1} parent=1 // pred_region
      _
    $region21: #{tpu_custom_call.1} parent=1 // pred_fallthru
      _
    // Predicated region
    $region22: #{tpu_custom_call.1} parent=1 // pred_check
      _
    $region23: #{tpu_custom_call.1} parent=1 // pred_check_branch
      %47 = sbr.rel (0) target = $region25
    $region24: #{tpu_custom_call.1} parent=1 // pred_region
      %49 = dma.done [#allocation4], 1024
    $region25: #{tpu_custom_call.1} parent=1 // pred_fallthru
      _
    // Predicated region
    $region26: #{tpu_custom_call.1} parent=1 // pred_check
      _
    $region27: #{tpu_custom_call.1} parent=1 // pred_check_branch
      %51 = sbr.rel (0) target = $region29
    $region28: #{tpu_custom_call.1} parent=1 // pred_region
      %53 = dma.done [#allocation7], 256
    $region29: #{tpu_custom_call.1} parent=1 // pred_fallthru
      _
    %v55 = vld [vmem:[#allocation3] sm:$0xf]
    %v56 = vld [vmem:[#allocation3 + $0x4] sm:$0xf]
    %v57 = vld [vmem:[#allocation3 + $0x8] sm:$0xf]
    %v58 = vld [vmem:[#allocation3 + $0xc] sm:$0xf]
    %v59 = vld [vmem:[#allocation3 + $0x10] sm:$0xf]
    %v60 = vld [vmem:[#allocation3 + $0x14] sm:$0xf]
    %v61 = vld [vmem:[#allocation3 + $0x18] sm:$0xf]
    %v62 = vld [vmem:[#allocation3 + $0x1c] sm:$0xf]
    %v63 = vld [vmem:[#allocation3 + $0x20] sm:$0xf]
    %v64 = vld [vmem:[#allocation3 + $0x24] sm:$0xf]
    %v65 = vld [vmem:[#allocation3 + $0x28] sm:$0xf]
    %v66 = vld [vmem:[#allocation3 + $0x2c] sm:$0xf]
    %v67 = vld [vmem:[#allocation3 + $0x30] sm:$0xf]
    %v68 = vld [vmem:[#allocation3 + $0x34] sm:$0xf]
    %v69 = vld [vmem:[#allocation3 + $0x38] sm:$0xf]
    %v70 = vld [vmem:[#allocation3 + $0x3c] sm:$0xf]
    %v71 = vld [vmem:[#allocation6] sm:$0xf]
    %v72 = vld [vmem:[#allocation6 + $0x4] sm:$0xf]
    %v73 = vld [vmem:[#allocation6 + $0x8] sm:$0xf]
    %v74 = vld [vmem:[#allocation6 + $0xc] sm:$0xf]
    %v75 = vld [vmem:[%s2] sm:$0x1]
    %v77 = vperm.slane %v75, 0
    %v95 = vunpack.c.l.b16 %v55
    %v96 = vunpack.c.l.b16 %v56
    %v97 = vunpack.c.l.b16 %v57
    %v98 = vunpack.c.l.b16 %v58
    %v99 = vunpack.c.l.b16 %v59
    %v100 = vunpack.c.l.b16 %v60
    %v101 = vunpack.c.l.b16 %v61
    %v102 = vunpack.c.l.b16 %v62
    %v103 = vunpack.c.l.b16 %v63
    %v104 = vunpack.c.l.b16 %v64
    %v105 = vunpack.c.l.b16 %v65
    %v106 = vunpack.c.l.b16 %v66
    %v107 = vunpack.c.l.b16 %v67
    %v108 = vunpack.c.l.b16 %v68
    %v109 = vunpack.c.l.b16 %v69
    %v110 = vunpack.c.l.b16 %v70
    %v111 = vpack.c.b16 %v96, %v95
    %v112 = vpack.c.b16 %v98, %v97
    %v113 = vpack.c.b16 %v100, %v99
    %v114 = vpack.c.b16 %v102, %v101
    %v115 = vpack.c.b16 %v104, %v103
    %v116 = vpack.c.b16 %v106, %v105
    %v117 = vpack.c.b16 %v108, %v107
    %v118 = vpack.c.b16 %v110, %v109
    %v123 = vunpack.c.l.b16 %v71
    %v124 = vunpack.c.l.b16 %v72
    %v125 = vunpack.c.l.b16 %v73
    %v126 = vunpack.c.l.b16 %v74
    %v127 = vpack.c.b16 %v124, %v123
    %v128 = vpack.c.b16 %v126, %v125
    %vm131 = vcmask 261120
    %v133 = vsel %vm131, %v111, 0
    %v136 = vsel %vm131, %v112, 0
    %v139 = vsel %vm131, %v113, 0
    %v142 = vsel %vm131, %v114, 0
    %v145 = vsel %vm131, %v115, 0
    %v148 = vsel %vm131, %v116, 0
    %v151 = vsel %vm131, %v117, 0
    %v154 = vsel %vm131, %v118, 0
    %156 = vmatpush.bf16.msra.mxu0 0
    %157 = vmatpush.bf16.msra.mxu0 0
    %158 = vmatpush.bf16.msra.mxu0 0
    %159 = vmatpush.bf16.msra.mxu0 0
    %160 = vmatpush.bf16.msra.mxu0 0
    %161 = vmatpush.bf16.msra.mxu0 0
    %162 = vmatpush.bf16.msra.mxu0 %v128
    %163 = vmatpush.bf16.msra.mxu0 %v127
    %164 = vmatmul.bf16.gmra.mxu0 %v133
    %v165 = vpop.f32.mrf.mxu0
    %v166 = vadd.f32 %v77, %v165
    %v167 = vpop.f32.mrf.mxu0
    %v168 = vadd.f32 %v77, %v167
    %169 = vmatmul.bf16.gmra.mxu0 %v136
    %v170 = vpop.f32.mrf.mxu0
    %v171 = vadd.f32 %v77, %v170
    %v172 = vpop.f32.mrf.mxu0
    %v173 = vadd.f32 %v77, %v172
    %174 = vmatmul.bf16.gmra.mxu0 %v139
    %v175 = vpop.f32.mrf.mxu0
    %v176 = vadd.f32 %v77, %v175
    %v177 = vpop.f32.mrf.mxu0
    %v178 = vadd.f32 %v77, %v177
    %179 = vmatmul.bf16.gmra.mxu0 %v142
    %v180 = vpop.f32.mrf.mxu0
    %v181 = vadd.f32 %v77, %v180
    %v182 = vpop.f32.mrf.mxu0
    %v183 = vadd.f32 %v77, %v182
    %184 = vmatmul.bf16.gmra.mxu0 %v145
    %v185 = vpop.f32.mrf.mxu0
    %v186 = vadd.f32 %v77, %v185
    %v187 = vpop.f32.mrf.mxu0
    %v188 = vadd.f32 %v77, %v187
    %189 = vmatmul.bf16.gmra.mxu0 %v148
    %v190 = vpop.f32.mrf.mxu0
    %v191 = vadd.f32 %v77, %v190
    %v192 = vpop.f32.mrf.mxu0
    %v193 = vadd.f32 %v77, %v192
    %194 = vmatmul.bf16.gmra.mxu0 %v151
    %v195 = vpop.f32.mrf.mxu0
    %v196 = vadd.f32 %v77, %v195
    %v197 = vpop.f32.mrf.mxu0
    %v198 = vadd.f32 %v77, %v197
    %199 = vmatmul.bf16.gmra.mxu0 %v154
    %v200 = vpop.f32.mrf.mxu0
    %v201 = vadd.f32 %v77, %v200
    %v202 = vpop.f32.mrf.mxu0
    %v203 = vadd.f32 %v77, %v202
    %204 = vdwg.mxu0
    %v205 = vmax.f32 %v166, 0.0
    %v206 = vmax.f32 %v168, 0.0
    %v207 = vmax.f32 %v171, 0.0
    %v208 = vmax.f32 %v173, 0.0
    %v209 = vmax.f32 %v176, 0.0
    %v210 = vmax.f32 %v178, 0.0
    %v211 = vmax.f32 %v181, 0.0
    %v212 = vmax.f32 %v183, 0.0
    %v213 = vmax.f32 %v186, 0.0
    %v214 = vmax.f32 %v188, 0.0
    %v215 = vmax.f32 %v191, 0.0
    %v216 = vmax.f32 %v193, 0.0
    %v217 = vmax.f32 %v196, 0.0
    %v218 = vmax.f32 %v198, 0.0
    %v219 = vmax.f32 %v201, 0.0
    %v220 = vmax.f32 %v203, 0.0
    %v221 = vld [vmem:[%s3] sm:$0x1]
    %v223 = vperm.slane %v221, 0
    %v225 = vmul.f32 %v205, %v223
    %v226 = vmul.f32 %v206, %v223
    %v227 = vmul.f32 %v207, %v223
    %v228 = vmul.f32 %v208, %v223
    %v229 = vmul.f32 %v209, %v223
    %v230 = vmul.f32 %v210, %v223
    %v231 = vmul.f32 %v211, %v223
    %v232 = vmul.f32 %v212, %v223
    %v233 = vmul.f32 %v213, %v223
    %v234 = vmul.f32 %v214, %v223
    %v235 = vmul.f32 %v215, %v223
    %v236 = vmul.f32 %v216, %v223
    %v237 = vmul.f32 %v217, %v223
    %v238 = vmul.f32 %v218, %v223
    %v239 = vmul.f32 %v219, %v223
    %v240 = vmul.f32 %v220, %v223
    %241 = vadd.xlane.f32.xlu0 %v225
    %v242 = vpop.xlane.xlu0 %241
    %243 = vadd.xlane.f32.xlu0 %v226
    %v244 = vpop.xlane.xlu0 %243
    %245 = vadd.xlane.f32.xlu0 %v227
    %v246 = vpop.xlane.xlu0 %245
    %247 = vadd.xlane.f32.xlu0 %v228
    %v248 = vpop.xlane.xlu0 %247
    %249 = vadd.xlane.f32.xlu0 %v229
    %v250 = vpop.xlane.xlu0 %249
    %251 = vadd.xlane.f32.xlu0 %v230
    %v252 = vpop.xlane.xlu0 %251
    %253 = vadd.xlane.f32.xlu0 %v231
    %v254 = vpop.xlane.xlu0 %253
    %255 = vadd.xlane.f32.xlu0 %v232
    %v256 = vpop.xlane.xlu0 %255
    %257 = vadd.xlane.f32.xlu0 %v233
    %v258 = vpop.xlane.xlu0 %257
    %259 = vadd.xlane.f32.xlu0 %v234
    %v260 = vpop.xlane.xlu0 %259
    %261 = vadd.xlane.f32.xlu0 %v235
    %v262 = vpop.xlane.xlu0 %261
    %263 = vadd.xlane.f32.xlu0 %v236
    %v264 = vpop.xlane.xlu0 %263
    %265 = vadd.xlane.f32.xlu0 %v237
    %v266 = vpop.xlane.xlu0 %265
    %267 = vadd.xlane.f32.xlu0 %v238
    %v268 = vpop.xlane.xlu0 %267
    %269 = vadd.xlane.f32.xlu0 %v239
    %v270 = vpop.xlane.xlu0 %269
    %271 = vadd.xlane.f32.xlu0 %v240
    %v272 = vpop.xlane.xlu0 %271
    %s273 = sld [smem:[#allocation2]]
    %v274 = vstv %s273
    %v275 = vadd.f32 %v242, %v274
    %v276 = vadd.f32 %v244, %v274
    %v277 = vadd.f32 %v246, %v274
    %v278 = vadd.f32 %v248, %v274
    %v279 = vadd.f32 %v250, %v274
    %v280 = vadd.f32 %v252, %v274
    %v281 = vadd.f32 %v254, %v274
    %v282 = vadd.f32 %v256, %v274
    %v283 = vadd.f32 %v258, %v274
    %v284 = vadd.f32 %v260, %v274
    %v285 = vadd.f32 %v262, %v274
    %v286 = vadd.f32 %v264, %v274
    %v287 = vadd.f32 %v266, %v274
    %v288 = vadd.f32 %v268, %v274
    %v289 = vadd.f32 %v270, %v274
    %v290 = vadd.f32 %v272, %v274
    %v307 = vlaneseq
    %v308 = vand.u32 %v307, 127
    %v309 = vperm.slane %v275, %v308
    %v310 = vadd.s32 %v308, 4294967288
    %v311 = vperm.slane %v276, %v310
    %vm312 = vcmask 130112
    %v313 = vsel %vm312, %v311, %v309
    %v314 = vadd.s32 %v308, 4294967280
    %v315 = vperm.slane %v277, %v314
    %vm316 = vcmask 195712
    %v317 = vsel %vm316, %v315, %v313
    %v318 = vadd.s32 %v308, 4294967272
    %v319 = vperm.slane %v278, %v318
    %vm320 = vcmask 261312
    %v321 = vsel %vm320, %v319, %v317
    %v322 = vadd.s32 %v308, 4294967264
    %v323 = vperm.slane %v279, %v322
    %vm324 = vcmask 326912
    %v325 = vsel %vm324, %v323, %v321
    %v326 = vadd.s32 %v308, 4294967256
    %v327 = vperm.slane %v280, %v326
    %vm328 = vcmask 392512
    %v329 = vsel %vm328, %v327, %v325
    %v330 = vadd.s32 %v308, 4294967248
    %v331 = vperm.slane %v281, %v330
    %vm332 = vcmask 458112
    %v333 = vsel %vm332, %v331, %v329
    %v334 = vadd.s32 %v308, 4294967240
    %v335 = vperm.slane %v282, %v334
    %vm336 = vcmask 523712
    %v337 = vsel %vm336, %v335, %v333
    %v338 = vadd.s32 %v308, 4294967232
    %v339 = vperm.slane %v283, %v338
    %vm340 = vcmask 589312
    %v341 = vsel %vm340, %v339, %v337
    %v342 = vadd.s32 %v308, 4294967224
    %v343 = vperm.slane %v284, %v342
    %vm344 = vcmask 654912
    %v345 = vsel %vm344, %v343, %v341
    %v346 = vadd.s32 %v308, 4294967216
    %v347 = vperm.slane %v285, %v346
    %vm348 = vcmask 720512
    %v349 = vsel %vm348, %v347, %v345
    %v350 = vadd.s32 %v308, 4294967208
    %v351 = vperm.slane %v286, %v350
    %vm352 = vcmask 786112
    %v353 = vsel %vm352, %v351, %v349
    %v354 = vadd.s32 %v308, 4294967200
    %v355 = vperm.slane %v287, %v354
    %vm356 = vcmask 851712
    %v357 = vsel %vm356, %v355, %v353
    %v358 = vadd.s32 %v308, 4294967192
    %v359 = vperm.slane %v288, %v358
    %vm360 = vcmask 917312
    %v361 = vsel %vm360, %v359, %v357
    %v362 = vadd.s32 %v308, 4294967184
    %v363 = vperm.slane %v289, %v362
    %vm364 = vcmask 982912
    %v365 = vsel %vm364, %v363, %v361
    %v366 = vadd.s32 %v308, 4294967176
    %v367 = vperm.slane %v290, %v366
    %vm368 = vcmask 1048512
    %v369 = vsel %vm368, %v367, %v365
    %371 = vst [vmem:[#allocation8] sm:$0x1] %v369
    // Predicated region
    $region30: #{tpu_custom_call.1} parent=1 // pred_check
      _
    $region31: #{tpu_custom_call.1} parent=1 // pred_check_branch
      %373 = sbr.rel (0) target = $region33
    $region32: #{tpu_custom_call.1} parent=1 // pred_region
      %375 = vsyncadd [#allocation5], 0
      %s377 = sshll.u32 [#allocation8], 4
      %s378 = int_to_ptr.vmem [resolvable:$true] %s377
      %s379 = sshll.u32 %s5, 4
      %s380 = int_to_ptr.hbm [resolvable:$true] %s379
      %382 = dma.vmem_to_hbm [thread:$0]  %s378, 16, %s380, [#allocation5]
    $region33: #{tpu_custom_call.1} parent=1 // pred_fallthru
      _
    // Predicated region
    $region34: #{tpu_custom_call.1} parent=1 // pred_check
      _
    $region35: #{tpu_custom_call.1} parent=1 // pred_check_branch
      %384 = sbr.rel (0) target = $region37
    $region36: #{tpu_custom_call.1} parent=1 // pred_region
      %386 = dma.done [#allocation5], 16
    $region37: #{tpu_custom_call.1} parent=1 // pred_fallthru
      _
    %387 = vsyncpa [#allocation4], 1
    %388 = vsyncpa [#allocation7], 1
    %389 = vsyncpa [#allocation5], 1

</llo_original>
